<compile_context>
chip_gen: v5e
topology: v5e:2x2
jax: 0.10.0
libtpu: 0.0.40
codegen_flags: <defaults>
</compile_context>

<pallas_src>
import math

import jax
import jax.numpy as jnp
from jax.experimental import pallas as pl
from jax.experimental.pallas import tpu as pltpu


# ----------------------------- Pallas kernel ------------------------------- #

def _value_net_kernel(x_ref,
                      w1_ref, b1_ref,
                      w2_ref, b2_ref,
                      w3_ref, b3_ref,
                      w4_ref, b4_ref,
                      o_ref):
    # Layer 1: (TB, S) @ (S, H) + (1, H), ReLU
    h = jnp.dot(x_ref[...], w1_ref[...], preferred_element_type=jnp.float32)
    h = jnp.maximum(h + b1_ref[...], 0.0)
    # Layer 2: (TB, H) @ (H, 2H) + (1, 2H), ReLU
    h = jnp.dot(h, w2_ref[...], preferred_element_type=jnp.float32)
    h = jnp.maximum(h + b2_ref[...], 0.0)
    # Layer 3: (TB, 2H) @ (2H, H) + (1, H), ReLU
    h = jnp.dot(h, w3_ref[...], preferred_element_type=jnp.float32)
    h = jnp.maximum(h + b3_ref[...], 0.0)
    # Head: (TB, H) @ (H, 1) + (1, 1)
    v = jnp.dot(h, w4_ref[...], preferred_element_type=jnp.float32) + b4_ref[...]
    o_ref[...] = v.astype(o_ref.dtype)


# ------------------------------- wrapper ------------------------------------ #

def _round_up(n, m):
    return ((n + m - 1) // m) * m


def value_net_pallas(params, x, *, tb=128):
    """Fused ValueNet forward: returns values of shape (B,)."""
    (w1, b1), (w2, b2), (w3, b3), (w4, b4) = params
    B, s_dim = x.shape

    # Batch tile: multiple of 8 sublanes; cap at the (padded) batch size.
    tb = min(tb, _round_up(B, 8))
    Bp = _round_up(B, tb)
    if Bp != B:
        x = jnp.pad(x, ((0, Bp - B), (0, 0)))

    weight_args = (w1, b1, w2, b2, w3, b3, w4, b4)
    in_specs = [pl.BlockSpec((tb, s_dim), lambda i: (i, 0))] + [
        pl.BlockSpec(a.shape, lambda i: (0, 0)) for a in weight_args
    ]

    out = pl.pallas_call(
        _value_net_kernel,
        out_shape=jax.ShapeDtypeStruct((Bp, 1), jnp.float32),
        grid=(pl.cdiv(Bp, tb),),
        in_specs=in_specs,
        out_specs=pl.BlockSpec((tb, 1), lambda i: (i, 0)),
        compiler_params=pltpu.CompilerParams(
            dimension_semantics=("parallel",)),
    )(x, *weight_args)

    return out[:B, 0]   # (B,) like torch's main(state)[:, 0]


# ------------------------- parameter construction -------------------------- #

def init_value_net_params(key, s_dim, n_hidden=512):
    """Deterministic analogue of nn.Linear default init (U(-1/sqrt(fan_in), ..)).

    Weights are stored transposed as (in, out) so the kernel computes x @ Wt + b.
    Biases are stored as (1, out) rows for direct VMEM broadcast.
    """
    dims = [s_dim, n_hidden, 2 * n_hidden, n_hidden, 1]
    params = []
    for din, dout in zip(dims[:-1], dims[1:]):
        key, kw, kb = jax.random.split(key, 3)
        bound = 1.0 / math.sqrt(din)
        w_t = jax.random.uniform(kw, (din, dout), jnp.float32, -bound, bound)
        b = jax.random.uniform(kb, (1, dout), jnp.float32, -bound, bound)
        params.append((w_t, b))
    return params


def value_net_reference(params, x):
    """Plain-JAX reference of the same forward pass."""
    h = x
    n = len(params)
    for i, (w_t, b) in enumerate(params):
        h = jnp.dot(h, w_t, precision=jax.lax.Precision.HIGHEST) + b
        if i < n - 1:
            h = jnp.maximum(h, 0.0)
    return h[:, 0]


# --------------------------------- main ------------------------------------ #

if __name__ == "__main__":
    key = jax.random.PRNGKey(0)
    k_p, k_x = jax.random.split(key)

    # Small demo shapes (torch default is n_hidden=512; semantics identical).
    B, S_DIM, N_HIDDEN = 256, 32, 32

    params = init_value_net_params(k_p, S_DIM, N_HIDDEN)
    x = jax.random.normal(k_x, (B, S_DIM), dtype=jnp.float32)

    v = jax.block_until_ready(value_net_pallas(params, x, tb=128))

    v_ref = value_net_reference(params, x)
    assert v.shape == (B,), f"bad output shape {v.shape}"
    assert jnp.allclose(v, v_ref, atol=1e-3, rtol=1e-3), "value mismatch"

    print("KERNEL_OK")
</pallas_src>

<mosaic_0001>
module attributes {stable_mosaic.version = 11 : i64} {
  func.func @_value_net_kernel(%arg0: i32, %arg1: memref<128x32xf32, #tpu.memory_space<vmem>>, %arg2: memref<32x32xf32, #tpu.memory_space<vmem>>, %arg3: memref<1x32xf32, #tpu.memory_space<vmem>>, %arg4: memref<32x64xf32, #tpu.memory_space<vmem>>, %arg5: memref<1x64xf32, #tpu.memory_space<vmem>>, %arg6: memref<64x32xf32, #tpu.memory_space<vmem>>, %arg7: memref<1x32xf32, #tpu.memory_space<vmem>>, %arg8: memref<32x1xf32, #tpu.memory_space<vmem>>, %arg9: memref<1x1xf32, #tpu.memory_space<vmem>>, %arg10: memref<128x1xf32, #tpu.memory_space<vmem>>) attributes {dimension_semantics = [#tpu.dimension_semantics<parallel>], iteration_bounds = array<i64: 2>, scalar_prefetch = 0 : i64, scratch_operands = 0 : i64, tpu.core_type = #tpu.core_type<tc>, window_params = [{transform_indices = @transform_0, window_bounds = array<i64: 128, 32>}, {pipeline_mode = #tpu.pipeline_mode<synchronous>, transform_indices = @transform_1, window_bounds = array<i64: 32, 32>}, {pipeline_mode = #tpu.pipeline_mode<synchronous>, transform_indices = @transform_2, window_bounds = array<i64: 1, 32>}, {pipeline_mode = #tpu.pipeline_mode<synchronous>, transform_indices = @transform_3, window_bounds = array<i64: 32, 64>}, {pipeline_mode = #tpu.pipeline_mode<synchronous>, transform_indices = @transform_4, window_bounds = array<i64: 1, 64>}, {pipeline_mode = #tpu.pipeline_mode<synchronous>, transform_indices = @transform_5, window_bounds = array<i64: 64, 32>}, {pipeline_mode = #tpu.pipeline_mode<synchronous>, transform_indices = @transform_6, window_bounds = array<i64: 1, 32>}, {pipeline_mode = #tpu.pipeline_mode<synchronous>, transform_indices = @transform_7, window_bounds = array<i64: 32, 1>}, {pipeline_mode = #tpu.pipeline_mode<synchronous>, transform_indices = @transform_8, window_bounds = array<i64: 1, 1>}, {transform_indices = @transform_9, window_bounds = array<i64: 128, 1>}]} {
    %c0 = arith.constant 0 : index
    %c0_0 = arith.constant 0 : index
    %0 = vector.load %arg1[%c0, %c0_0] : memref<128x32xf32, #tpu.memory_space<vmem>>, vector<128x32xf32>
    %c0_1 = arith.constant 0 : index
    %c0_2 = arith.constant 0 : index
    %1 = vector.load %arg2[%c0_1, %c0_2] : memref<32x32xf32, #tpu.memory_space<vmem>>, vector<32x32xf32>
    %cst = arith.constant dense<0.000000e+00> : vector<128x32xf32>
    %2 = tpu.matmul %0, %1, %cst {dimension_numbers = #tpu.dot_dimension_numbers<[1], [0], [0], [1], [0, 0, 1, 1], [], []>} : vector<128x32xf32>, vector<32x32xf32>, vector<128x32xf32> -> vector<128x32xf32>
    %c0_3 = arith.constant 0 : index
    %c0_4 = arith.constant 0 : index
    %3 = vector.load %arg3[%c0_3, %c0_4] : memref<1x32xf32, #tpu.memory_space<vmem>>, vector<1x32xf32>
    %4 = vector.broadcast %3 : vector<1x32xf32> to vector<128x32xf32>
    %5 = arith.addf %2, %4 : vector<128x32xf32>
    %cst_5 = arith.constant 0.000000e+00 : f32
    %6 = vector.broadcast %cst_5 : f32 to vector<128x32xf32>
    %7 = arith.maximumf %5, %6 : vector<128x32xf32>
    %c0_6 = arith.constant 0 : index
    %c0_7 = arith.constant 0 : index
    %8 = vector.load %arg4[%c0_6, %c0_7] : memref<32x64xf32, #tpu.memory_space<vmem>>, vector<32x64xf32>
    %cst_8 = arith.constant dense<0.000000e+00> : vector<128x64xf32>
    %9 = tpu.matmul %7, %8, %cst_8 {dimension_numbers = #tpu.dot_dimension_numbers<[1], [0], [0], [1], [0, 0, 1, 1], [], []>} : vector<128x32xf32>, vector<32x64xf32>, vector<128x64xf32> -> vector<128x64xf32>
    %c0_9 = arith.constant 0 : index
    %c0_10 = arith.constant 0 : index
    %10 = vector.load %arg5[%c0_9, %c0_10] : memref<1x64xf32, #tpu.memory_space<vmem>>, vector<1x64xf32>
    %11 = vector.broadcast %10 : vector<1x64xf32> to vector<128x64xf32>
    %12 = arith.addf %9, %11 : vector<128x64xf32>
    %cst_11 = arith.constant 0.000000e+00 : f32
    %13 = vector.broadcast %cst_11 : f32 to vector<128x64xf32>
    %14 = arith.maximumf %12, %13 : vector<128x64xf32>
    %c0_12 = arith.constant 0 : index
    %c0_13 = arith.constant 0 : index
    %15 = vector.load %arg6[%c0_12, %c0_13] : memref<64x32xf32, #tpu.memory_space<vmem>>, vector<64x32xf32>
    %cst_14 = arith.constant dense<0.000000e+00> : vector<128x32xf32>
    %16 = tpu.matmul %14, %15, %cst_14 {dimension_numbers = #tpu.dot_dimension_numbers<[1], [0], [0], [1], [0, 0, 1, 1], [], []>} : vector<128x64xf32>, vector<64x32xf32>, vector<128x32xf32> -> vector<128x32xf32>
    %c0_15 = arith.constant 0 : index
    %c0_16 = arith.constant 0 : index
    %17 = vector.load %arg7[%c0_15, %c0_16] : memref<1x32xf32, #tpu.memory_space<vmem>>, vector<1x32xf32>
    %18 = vector.broadcast %17 : vector<1x32xf32> to vector<128x32xf32>
    %19 = arith.addf %16, %18 : vector<128x32xf32>
    %cst_17 = arith.constant 0.000000e+00 : f32
    %20 = vector.broadcast %cst_17 : f32 to vector<128x32xf32>
    %21 = arith.maximumf %19, %20 : vector<128x32xf32>
    %c0_18 = arith.constant 0 : index
    %c0_19 = arith.constant 0 : index
    %22 = vector.load %arg8[%c0_18, %c0_19] : memref<32x1xf32, #tpu.memory_space<vmem>>, vector<32x1xf32>
    %cst_20 = arith.constant dense<0.000000e+00> : vector<128x1xf32>
    %23 = tpu.matmul %21, %22, %cst_20 {dimension_numbers = #tpu.dot_dimension_numbers<[1], [0], [0], [1], [0, 0, 1, 1], [], []>} : vector<128x32xf32>, vector<32x1xf32>, vector<128x1xf32> -> vector<128x1xf32>
    %c0_21 = arith.constant 0 : index
    %c0_22 = arith.constant 0 : index
    %24 = vector.load %arg9[%c0_21, %c0_22] : memref<1x1xf32, #tpu.memory_space<vmem>>, vector<1x1xf32>
    %25 = vector.broadcast %24 : vector<1x1xf32> to vector<128x1xf32>
    %26 = arith.addf %23, %25 : vector<128x1xf32>
    %c0_23 = arith.constant 0 : index
    %c0_24 = arith.constant 0 : index
    %27 = vector.load %arg10[%c0_23, %c0_24] : memref<128x1xf32, #tpu.memory_space<vmem>>, vector<128x1xf32>
    tpu.vector_store %arg10[%c0_23, %c0_24], %26 {strides = array<i32>} : memref<128x1xf32, #tpu.memory_space<vmem>>, vector<128x1xf32>,
    return
  }
  func.func @transform_0(%arg0: i32) -> (i32, i32) {
    %c0_i32 = arith.constant 0 : i32
    %c0_i32_0 = arith.constant 0 : i32
    return %arg0, %c0_i32 : i32, i32
  }
  func.func @transform_1(%arg0: i32) -> (i32, i32) {
    %c0_i32 = arith.constant 0 : i32
    %c0_i32_0 = arith.constant 0 : i32
    %c0_i32_1 = arith.constant 0 : i32
    return %c0_i32, %c0_i32_0 : i32, i32
  }
  func.func @transform_2(%arg0: i32) -> (i32, i32) {
    %c0_i32 = arith.constant 0 : i32
    %c0_i32_0 = arith.constant 0 : i32
    %c0_i32_1 = arith.constant 0 : i32
    return %c0_i32, %c0_i32_0 : i32, i32
  }
  func.func @transform_3(%arg0: i32) -> (i32, i32) {
    %c0_i32 = arith.constant 0 : i32
    %c0_i32_0 = arith.constant 0 : i32
    %c0_i32_1 = arith.constant 0 : i32
    return %c0_i32, %c0_i32_0 : i32, i32
  }
  func.func @transform_4(%arg0: i32) -> (i32, i32) {
    %c0_i32 = arith.constant 0 : i32
    %c0_i32_0 = arith.constant 0 : i32
    %c0_i32_1 = arith.constant 0 : i32
    return %c0_i32, %c0_i32_0 : i32, i32
  }
  func.func @transform_5(%arg0: i32) -> (i32, i32) {
    %c0_i32 = arith.constant 0 : i32
    %c0_i32_0 = arith.constant 0 : i32
    %c0_i32_1 = arith.constant 0 : i32
    return %c0_i32, %c0_i32_0 : i32, i32
  }
  func.func @transform_6(%arg0: i32) -> (i32, i32) {
    %c0_i32 = arith.constant 0 : i32
    %c0_i32_0 = arith.constant 0 : i32
    %c0_i32_1 = arith.constant 0 : i32
    return %c0_i32, %c0_i32_0 : i32, i32
  }
  func.func @transform_7(%arg0: i32) -> (i32, i32) {
    %c0_i32 = arith.constant 0 : i32
    %c0_i32_0 = arith.constant 0 : i32
    %c0_i32_1 = arith.constant 0 : i32
    return %c0_i32, %c0_i32_0 : i32, i32
  }
  func.func @transform_8(%arg0: i32) -> (i32, i32) {
    %c0_i32 = arith.constant 0 : i32
    %c0_i32_0 = arith.constant 0 : i32
    %c0_i32_1 = arith.constant 0 : i32
    return %c0_i32, %c0_i32_0 : i32, i32
  }
  func.func @transform_9(%arg0: i32) -> (i32, i32) {
    %c0_i32 = arith.constant 0 : i32
    %c0_i32_0 = arith.constant 0 : i32
    return %arg0, %c0_i32 : i32, i32
  }
}

</mosaic_0001>

<llo_original>
// kernel: tpu_custom_call.1
$region0: #{tpu_custom_call.1}
  #allocation0 [shape = 'u32[]', space=smem, size = 0x4, offset = 0x4, fixed_abs, tag = 'smem constant byte address 0x4 - core index']
  #allocation1 [shape = 'u32[72,128]{1,0:T(1,128)}', space=vmem, size = 0x9000, scoped, tag = 'internal scratch']
  #allocation2 [shape = 'f32[1,1]{1,0:T(1,128)S(1)}', space=vmem, size = 0x200, scoped, tag = 'scoped memory for tpu_custom_call.1']
  %s0 = inlined_call_operand.vmem [shape: f32[256,32], index: 0, kind: input, shape index: {}]
  %s1 = inlined_call_operand.vmem [shape: f32[32,32], index: 1, kind: input, shape index: {}]
  %s2 = inlined_call_operand.vmem [shape: f32[1,32], index: 2, kind: input, shape index: {}]
  %s3 = inlined_call_operand.vmem [shape: f32[32,64], index: 3, kind: input, shape index: {}]
  %s4 = inlined_call_operand.vmem [shape: f32[1,64], index: 4, kind: input, shape index: {}]
  %s5 = inlined_call_operand.vmem [shape: f32[64,32], index: 5, kind: input, shape index: {}]
  %s6 = inlined_call_operand.vmem [shape: f32[1,32], index: 6, kind: input, shape index: {}]
  %s7 = inlined_call_operand.vmem [shape: f32[32,1], index: 7, kind: input, shape index: {}]
  %s8 = inlined_call_operand.<no memory space> [shape: f32[1,1], index: 8, kind: input, shape index: {}]
  %s9 = inlined_call_operand.vmem [shape: f32[256,1], index: 9, kind: output, shape index: {}]
  %s10 = sld [smem:[#allocation0]]
  $region69: #{tpu_custom_call.1} parent=0
    _
  %s12 = ssub.s32 1, %s10
  %s13 = scalar_select 0, %s12, %s10
  %v14 = vstv %s8
  %15 = vst [vmem:[#allocation2] sm:$0x1] %v14
  loop: start=0, step=1, limit=4
  $region2: #{tpu_custom_call.1} parent=0 // loop_pre_header
    _
  $region3: #{tpu_custom_call.1} parent=0 // loop_header
    %s17 = sphi 0, %s21
    %p18 = scmp.ge.s32.totalorder %s17, 4
    %s27 = sphi 0, %s29
    %s30 = sphi 0, %s27
    %s31 = sphi 0, %s30
    %s47 = sphi 0, %s31
    %s51 = sphi 0, %s51
    %s53 = sphi 0, %s51
    %s54 = sphi 0, %s53
    %s68 = sphi 0, %s54
    %s72 = sphi 0, %s72
    %s74 = sphi 0, %s72
    %s75 = sphi 0, %s74
    %s89 = sphi 0, %s75
    %s93 = sphi 0, %s93
    %s95 = sphi 0, %s93
    %s96 = sphi 0, %s95
    %s110 = sphi 0, %s96
    %s114 = sphi 0, %s114
    %s116 = sphi 0, %s114
    %s117 = sphi 0, %s116
    %s131 = sphi 0, %s117
    %s135 = sphi 0, %s135
    %s137 = sphi 0, %s135
    %s138 = sphi 0, %s137
    %s152 = sphi 0, %s138
    %s156 = sphi 0, %s156
    %s158 = sphi 0, %s156
    %s159 = sphi 0, %s158
    %s173 = sphi 0, %s159
    %s177 = sphi 0, %s177
    %s179 = sphi 0, %s177
    %s180 = sphi 0, %s179
    %s194 = sphi 0, %s180
    %s198 = sphi 0, %s198
    %s200 = sphi 0, %s198
    %s201 = sphi 0, %s200
    %s215 = sphi 0, %s201
    %s221 = sphi 0, %s223
    %s224 = sphi 0, %s221
    %s225 = sphi 0, %s224
    %s241 = sphi 0, %s225
  $region4: #{tpu_custom_call.1} parent=0 // loop_header_branch
    %20 = sbr.rel (%p18) target = $region8
  $region5: #{tpu_custom_call.1} parent=0 // loop_body
    %s22 = ssub.s32 %s17, 1
    %s23 = ssub.s32 %s17, 2
    %s24 = sadd.s32 %s17, 1
    %s25 = ssub.s32 %s17, %s24
    %p26 = scmp.eq.s32.totalorder %s25, 0
    %s28 = sadd.s32 %s27, 1
    %s29 = scalar_select %p26, %s27, %s28
    %p32 = pneg %p26
    %p33 = scmp.eq.s32.totalorder %s17, 1
    %p34 = por %p32, %p33
    %p35 = scmp.ne.s32.totalorder %s27, %s30
    %p36 = scmp.eq.s32.totalorder %s17, 0
    %p37 = por %p35, %p36
    %p38 = scmp.ne.s32.totalorder %s27, %s30
    %p39 = scmp.eq.s32.totalorder %s22, 1
    %p40 = por %p38, %p39
    %p41 = scmp.ne.s32.totalorder %s30, %s31
    %p42 = scmp.eq.s32.totalorder %s22, 0
    %p43 = por %p41, %p42
    %p44 = scmp.ne.s32.totalorder %s30, %s31
    %p45 = scmp.eq.s32.totalorder %s23, 1
    %p46 = por %p44, %p45
    %p48 = scmp.ne.s32.totalorder %s31, %s47
    %p49 = scmp.eq.s32.totalorder %s23, 0
    %p50 = por %p48, %p49
    %s52 = sadd.s32 %s51, 1
    %p55 = scmp.eq.s32.totalorder %s17, 1
    %p56 = scmp.ne.s32.totalorder %s51, %s53
    %p57 = scmp.eq.s32.totalorder %s17, 0
    %p58 = por %p56, %p57
    %p59 = scmp.ne.s32.totalorder %s51, %s53
    %p60 = scmp.eq.s32.totalorder %s22, 1
    %p61 = por %p59, %p60
    %p62 = scmp.ne.s32.totalorder %s53, %s54
    %p63 = scmp.eq.s32.totalorder %s22, 0
    %p64 = por %p62, %p63
    %p65 = scmp.ne.s32.totalorder %s53, %s54
    %p66 = scmp.eq.s32.totalorder %s23, 1
    %p67 = por %p65, %p66
    %p69 = scmp.ne.s32.totalorder %s54, %s68
    %p70 = scmp.eq.s32.totalorder %s23, 0
    %p71 = por %p69, %p70
    %s73 = sadd.s32 %s72, 1
    %p76 = scmp.eq.s32.totalorder %s17, 1
    %p77 = scmp.ne.s32.totalorder %s72, %s74
    %p78 = scmp.eq.s32.totalorder %s17, 0
    %p79 = por %p77, %p78
    %p80 = scmp.ne.s32.totalorder %s72, %s74
    %p81 = scmp.eq.s32.totalorder %s22, 1
    %p82 = por %p80, %p81
    %p83 = scmp.ne.s32.totalorder %s74, %s75
    %p84 = scmp.eq.s32.totalorder %s22, 0
    %p85 = por %p83, %p84
    %p86 = scmp.ne.s32.totalorder %s74, %s75
    %p87 = scmp.eq.s32.totalorder %s23, 1
    %p88 = por %p86, %p87
    %p90 = scmp.ne.s32.totalorder %s75, %s89
    %p91 = scmp.eq.s32.totalorder %s23, 0
    %p92 = por %p90, %p91
    %s94 = sadd.s32 %s93, 1
    %p97 = scmp.eq.s32.totalorder %s17, 1
    %p98 = scmp.ne.s32.totalorder %s93, %s95
    %p99 = scmp.eq.s32.totalorder %s17, 0
    %p100 = por %p98, %p99
    %p101 = scmp.ne.s32.totalorder %s93, %s95
    %p102 = scmp.eq.s32.totalorder %s22, 1
    %p103 = por %p101, %p102
    %p104 = scmp.ne.s32.totalorder %s95, %s96
    %p105 = scmp.eq.s32.totalorder %s22, 0
    %p106 = por %p104, %p105
    %p107 = scmp.ne.s32.totalorder %s95, %s96
    %p108 = scmp.eq.s32.totalorder %s23, 1
    %p109 = por %p107, %p108
    %p111 = scmp.ne.s32.totalorder %s96, %s110
    %p112 = scmp.eq.s32.totalorder %s23, 0
    %p113 = por %p111, %p112
    %s115 = sadd.s32 %s114, 1
    %p118 = scmp.eq.s32.totalorder %s17, 1
    %p119 = scmp.ne.s32.totalorder %s114, %s116
    %p120 = scmp.eq.s32.totalorder %s17, 0
    %p121 = por %p119, %p120
    %p122 = scmp.ne.s32.totalorder %s114, %s116
    %p123 = scmp.eq.s32.totalorder %s22, 1
    %p124 = por %p122, %p123
    %p125 = scmp.ne.s32.totalorder %s116, %s117
    %p126 = scmp.eq.s32.totalorder %s22, 0
    %p127 = por %p125, %p126
    %p128 = scmp.ne.s32.totalorder %s116, %s117
    %p129 = scmp.eq.s32.totalorder %s23, 1
    %p130 = por %p128, %p129
    %p132 = scmp.ne.s32.totalorder %s117, %s131
    %p133 = scmp.eq.s32.totalorder %s23, 0
    %p134 = por %p132, %p133
    %s136 = sadd.s32 %s135, 1
    %p139 = scmp.eq.s32.totalorder %s17, 1
    %p140 = scmp.ne.s32.totalorder %s135, %s137
    %p141 = scmp.eq.s32.totalorder %s17, 0
    %p142 = por %p140, %p141
    %p143 = scmp.ne.s32.totalorder %s135, %s137
    %p144 = scmp.eq.s32.totalorder %s22, 1
    %p145 = por %p143, %p144
    %p146 = scmp.ne.s32.totalorder %s137, %s138
    %p147 = scmp.eq.s32.totalorder %s22, 0
    %p148 = por %p146, %p147
    %p149 = scmp.ne.s32.totalorder %s137, %s138
    %p150 = scmp.eq.s32.totalorder %s23, 1
    %p151 = por %p149, %p150
    %p153 = scmp.ne.s32.totalorder %s138, %s152
    %p154 = scmp.eq.s32.totalorder %s23, 0
    %p155 = por %p153, %p154
    %s157 = sadd.s32 %s156, 1
    %p160 = scmp.eq.s32.totalorder %s17, 1
    %p161 = scmp.ne.s32.totalorder %s156, %s158
    %p162 = scmp.eq.s32.totalorder %s17, 0
    %p163 = por %p161, %p162
    %p164 = scmp.ne.s32.totalorder %s156, %s158
    %p165 = scmp.eq.s32.totalorder %s22, 1
    %p166 = por %p164, %p165
    %p167 = scmp.ne.s32.totalorder %s158, %s159
    %p168 = scmp.eq.s32.totalorder %s22, 0
    %p169 = por %p167, %p168
    %p170 = scmp.ne.s32.totalorder %s158, %s159
    %p171 = scmp.eq.s32.totalorder %s23, 1
    %p172 = por %p170, %p171
    %p174 = scmp.ne.s32.totalorder %s159, %s173
    %p175 = scmp.eq.s32.totalorder %s23, 0
    %p176 = por %p174, %p175
    %s178 = sadd.s32 %s177, 1
    %p181 = scmp.eq.s32.totalorder %s17, 1
    %p182 = scmp.ne.s32.totalorder %s177, %s179
    %p183 = scmp.eq.s32.totalorder %s17, 0
    %p184 = por %p182, %p183
    %p185 = scmp.ne.s32.totalorder %s177, %s179
    %p186 = scmp.eq.s32.totalorder %s22, 1
    %p187 = por %p185, %p186
    %p188 = scmp.ne.s32.totalorder %s179, %s180
    %p189 = scmp.eq.s32.totalorder %s22, 0
    %p190 = por %p188, %p189
    %p191 = scmp.ne.s32.totalorder %s179, %s180
    %p192 = scmp.eq.s32.totalorder %s23, 1
    %p193 = por %p191, %p192
    %p195 = scmp.ne.s32.totalorder %s180, %s194
    %p196 = scmp.eq.s32.totalorder %s23, 0
    %p197 = por %p195, %p196
    %s199 = sadd.s32 %s198, 1
    %p202 = scmp.eq.s32.totalorder %s17, 1
    %p203 = scmp.ne.s32.totalorder %s198, %s200
    %p204 = scmp.eq.s32.totalorder %s17, 0
    %p205 = por %p203, %p204
    %p206 = scmp.ne.s32.totalorder %s198, %s200
    %p207 = scmp.eq.s32.totalorder %s22, 1
    %p208 = por %p206, %p207
    %p209 = scmp.ne.s32.totalorder %s200, %s201
    %p210 = scmp.eq.s32.totalorder %s22, 0
    %p211 = por %p209, %p210
    %p212 = scmp.ne.s32.totalorder %s200, %s201
    %p213 = scmp.eq.s32.totalorder %s23, 1
    %p214 = por %p212, %p213
    %p216 = scmp.ne.s32.totalorder %s201, %s215
    %p217 = scmp.eq.s32.totalorder %s23, 0
    %p218 = por %p216, %p217
    %s219 = ssub.s32 %s17, %s24
    %p220 = scmp.eq.s32.totalorder %s219, 0
    %s222 = sadd.s32 %s221, 1
    %s223 = scalar_select %p220, %s221, %s222
    %p226 = pneg %p220
    %p227 = scmp.eq.s32.totalorder %s17, 1
    %p228 = por %p226, %p227
    %p229 = scmp.ne.s32.totalorder %s221, %s224
    %p230 = scmp.eq.s32.totalorder %s17, 0
    %p231 = por %p229, %p230
    %p232 = scmp.ne.s32.totalorder %s221, %s224
    %p233 = scmp.eq.s32.totalorder %s22, 1
    %p234 = por %p232, %p233
    %p235 = scmp.ne.s32.totalorder %s224, %s225
    %p236 = scmp.eq.s32.totalorder %s22, 0
    %p237 = por %p235, %p236
    %p238 = scmp.ne.s32.totalorder %s224, %s225
    %p239 = scmp.eq.s32.totalorder %s23, 1
    %p240 = por %p238, %p239
    %p242 = scmp.ne.s32.totalorder %s225, %s241
    %p243 = scmp.eq.s32.totalorder %s23, 0
    %p244 = por %p242, %p243
    %p245 = scmp.le.s32.totalorder 1, %s17
    %p246 = scmp.lt.s32.totalorder %s17, 3
    %p247 = pnand %p245, %p246
    %p248 = pneg %p247
    // Predicated region
    $region9: #{tpu_custom_call.1} parent=5 // pred_check
      _
    $region10: #{tpu_custom_call.1} parent=5 // pred_check_branch
      %250 = sbr.rel (%p247) target = $region12
    $region11: #{tpu_custom_call.1} parent=5 // pred_region
      %s251 = ssub.s32 %s17, 1
      // Predicated region
      $region13: #{tpu_custom_call.1} parent=11 // pred_check
        %p252 = pneg %p64
      $region14: #{tpu_custom_call.1} parent=11 // pred_check_branch
        %254 = sbr.rel (%p252) target = $region16
      $region15: #{tpu_custom_call.1} parent=11 // pred_region
        _
      $region16: #{tpu_custom_call.1} parent=11 // pred_fallthru
        _
      // Predicated region
      $region17: #{tpu_custom_call.1} parent=11 // pred_check
        %p255 = pneg %p85
      $region18: #{tpu_custom_call.1} parent=11 // pred_check_branch
        %257 = sbr.rel (%p255) target = $region20
      $region19: #{tpu_custom_call.1} parent=11 // pred_region
        _
      $region20: #{tpu_custom_call.1} parent=11 // pred_fallthru
        _
      // Predicated region
      $region21: #{tpu_custom_call.1} parent=11 // pred_check
        %p258 = pneg %p106
      $region22: #{tpu_custom_call.1} parent=11 // pred_check_branch
        %260 = sbr.rel (%p258) target = $region24
      $region23: #{tpu_custom_call.1} parent=11 // pred_region
        _
      $region24: #{tpu_custom_call.1} parent=11 // pred_fallthru
        _
      // Predicated region
      $region25: #{tpu_custom_call.1} parent=11 // pred_check
        %p261 = pneg %p127
      $region26: #{tpu_custom_call.1} parent=11 // pred_check_branch
        %263 = sbr.rel (%p261) target = $region28
      $region27: #{tpu_custom_call.1} parent=11 // pred_region
        _
      $region28: #{tpu_custom_call.1} parent=11 // pred_fallthru
        _
      // Predicated region
      $region29: #{tpu_custom_call.1} parent=11 // pred_check
        %p264 = pneg %p148
      $region30: #{tpu_custom_call.1} parent=11 // pred_check_branch
        %266 = sbr.rel (%p264) target = $region32
      $region31: #{tpu_custom_call.1} parent=11 // pred_region
        _
      $region32: #{tpu_custom_call.1} parent=11 // pred_fallthru
        _
      // Predicated region
      $region33: #{tpu_custom_call.1} parent=11 // pred_check
        %p267 = pneg %p169
      $region34: #{tpu_custom_call.1} parent=11 // pred_check_branch
        %269 = sbr.rel (%p267) target = $region36
      $region35: #{tpu_custom_call.1} parent=11 // pred_region
        _
      $region36: #{tpu_custom_call.1} parent=11 // pred_fallthru
        _
      // Predicated region
      $region37: #{tpu_custom_call.1} parent=11 // pred_check
        %p270 = pneg %p190
      $region38: #{tpu_custom_call.1} parent=11 // pred_check_branch
        %272 = sbr.rel (%p270) target = $region40
      $region39: #{tpu_custom_call.1} parent=11 // pred_region
        _
      $region40: #{tpu_custom_call.1} parent=11 // pred_fallthru
        _
      // Predicated region
      $region41: #{tpu_custom_call.1} parent=11 // pred_check
        %p273 = pneg %p211
      $region42: #{tpu_custom_call.1} parent=11 // pred_check_branch
        %275 = sbr.rel (%p273) target = $region44
      $region43: #{tpu_custom_call.1} parent=11 // pred_region
        _
      $region44: #{tpu_custom_call.1} parent=11 // pred_fallthru
        _
    $region12: #{tpu_custom_call.1} parent=5 // pred_fallthru
      _
    %p276 = scmp.lt.s32.totalorder %s17, 2
    // Predicated region
    $region45: #{tpu_custom_call.1} parent=5 // pred_check
      %p277 = pneg %p276
    $region46: #{tpu_custom_call.1} parent=5 // pred_check_branch
      %279 = sbr.rel (%p277) target = $region48
    $region47: #{tpu_custom_call.1} parent=5 // pred_region
      // Predicated region
      $region49: #{tpu_custom_call.1} parent=47 // pred_check
        %p280 = pneg %p37
      $region50: #{tpu_custom_call.1} parent=47 // pred_check_branch
        %282 = sbr.rel (%p280) target = $region52
      $region51: #{tpu_custom_call.1} parent=47 // pred_region
        %s283 = smul.u32 16, %s17
        %p284 = scmp.lt.s32.totalorder %s283, 31
        %s285 = scalar_select %p284, %s283, 31
        %s286 = smul.addr %s285, 8
        %s287 = scalar_lea.vmem %s0, %s286
        %s288 = smul.u32 16, %s17
      $region52: #{tpu_custom_call.1} parent=47 // pred_fallthru
        _
    $region48: #{tpu_custom_call.1} parent=5 // pred_fallthru
      _
    %p289 = scmp.le.s32.totalorder 1, %s17
    %p290 = scmp.lt.s32.totalorder %s17, 3
    %p291 = pnand %p289, %p290
    %p292 = pneg %p291
    // Predicated region
    $region53: #{tpu_custom_call.1} parent=5 // pred_check
      _
    $region54: #{tpu_custom_call.1} parent=5 // pred_check_branch
      %294 = sbr.rel (%p291) target = $region56
    $region55: #{tpu_custom_call.1} parent=5 // pred_region
      %s295 = ssub.s32 %s17, 1
      %s296 = smul.u32 16, %s22
      %p297 = scmp.lt.s32.totalorder %s296, 31
      %s298 = scalar_select %p297, %s296, 31
      %s299 = smul.addr %s298, 8
      %s300 = scalar_lea.vmem %s0, %s299
      %p301 = pneg %p43
      %p302 = pneg %p40
      %p303 = pneg %p64
      %p304 = pneg %p61
      %p305 = pneg %p85
      %p306 = pneg %p82
      %p307 = pneg %p106
      %p308 = pneg %p103
      %p309 = pneg %p127
      %p310 = pneg %p124
      %p311 = pneg %p148
      %p312 = pneg %p145
      %p313 = pneg %p169
      %p314 = pneg %p166
      %p315 = pneg %p190
      %p316 = pneg %p187
      %p317 = pneg %p211
      %p318 = pneg %p208
      %p319 = pneg %p237
      %p320 = pneg %p234
      %s321 = smul.u32 16, %s22
      %p322 = scmp.lt.s32.totalorder %s321, 31
      %s323 = scalar_select %p322, %s321, 31
      %s324 = smul.addr %s323, 8
      %s325 = scalar_lea.vmem %s9, %s324
      %s326 = smul.u32 16, %s22
      %p327 = scmp.lt.s32.totalorder %s326, 31
      %s328 = scalar_select %p327, %s326, 31
      %s329 = smul.addr %s328, 8
      %s330 = scalar_lea.vmem %s0, %s329
      %s331 = smul.u32 16, %s22
      %s332 = smul.u32 16, %s22
      %p333 = scmp.lt.s32.totalorder %s332, 31
      %s334 = scalar_select %p333, %s332, 31
      %s335 = smul.addr %s334, 8
      %s336 = scalar_lea.vmem %s9, %s335
      %s337 = smul.u32 16, %s22
      %v338 = vld [vmem:[%s330] sm:$0xff]
      %v339 = vld [vmem:[%s330 + $0x8] sm:$0xff]
      %v340 = vld [vmem:[%s330 + $0x10] sm:$0xff]
      %v341 = vld [vmem:[%s330 + $0x18] sm:$0xff]
      %v342 = vld [vmem:[%s330 + $0x20] sm:$0xff]
      %v343 = vld [vmem:[%s330 + $0x28] sm:$0xff]
      %v344 = vld [vmem:[%s330 + $0x30] sm:$0xff]
      %v345 = vld [vmem:[%s330 + $0x38] sm:$0xff]
      %v346 = vld [vmem:[%s330 + $0x40] sm:$0xff]
      %v347 = vld [vmem:[%s330 + $0x48] sm:$0xff]
      %v348 = vld [vmem:[%s330 + $0x50] sm:$0xff]
      %v349 = vld [vmem:[%s330 + $0x58] sm:$0xff]
      %v350 = vld [vmem:[%s330 + $0x60] sm:$0xff]
      %v351 = vld [vmem:[%s330 + $0x68] sm:$0xff]
      %v352 = vld [vmem:[%s330 + $0x70] sm:$0xff]
      %v353 = vld [vmem:[%s330 + $0x78] sm:$0xff]
      %v354 = vld [vmem:[%s1] sm:$0xff]
      %v355 = vld [vmem:[%s1 + $0x8] sm:$0xff]
      %v356 = vld [vmem:[%s1 + $0x10] sm:$0xff]
      %v357 = vld [vmem:[%s1 + $0x18] sm:$0xff]
      %v358 = vld [vmem:[%s2] sm:$0x1]
      %v360 = vperm.slane %v358, 0
      %vm362 = vcmask 261120
      %v364 = vsel %vm362, %v338, 0
      %v367 = vsel %vm362, %v339, 0
      %v370 = vsel %vm362, %v340, 0
      %v373 = vsel %vm362, %v341, 0
      %v376 = vsel %vm362, %v342, 0
      %v379 = vsel %vm362, %v343, 0
      %v382 = vsel %vm362, %v344, 0
      %v385 = vsel %vm362, %v345, 0
      %v388 = vsel %vm362, %v346, 0
      %v391 = vsel %vm362, %v347, 0
      %v394 = vsel %vm362, %v348, 0
      %v397 = vsel %vm362, %v349, 0
      %v400 = vsel %vm362, %v350, 0
      %v403 = vsel %vm362, %v351, 0
      %v406 = vsel %vm362, %v352, 0
      %v409 = vsel %vm362, %v353, 0
      %411 = vmatpush.msra.mxu0 0.0
      %412 = vmatpush.msra.mxu0 0.0
      %413 = vmatpush.msra.mxu0 0.0
      %414 = vmatpush.msra.mxu0 0.0
      %415 = vmatpush.msra.mxu0 0.0
      %416 = vmatpush.msra.mxu0 0.0
      %417 = vmatpush.msra.mxu0 0.0
      %418 = vmatpush.msra.mxu0 0.0
      %419 = vmatpush.msra.mxu0 0.0
      %420 = vmatpush.msra.mxu0 0.0
      %421 = vmatpush.msra.mxu0 0.0
      %422 = vmatpush.msra.mxu0 0.0
      %423 = vmatpush.msra.mxu0 %v357
      %424 = vmatpush.msra.mxu0 %v356
      %425 = vmatpush.msra.mxu0 %v355
      %426 = vmatpush.msra.mxu0 %v354
      %427 = vmatmul.f32.gmra.mxu0 %v364
      %v428 = vpop.f32.mrf.mxu0
      %v429 = vadd.f32 %v360, %v428
      %430 = vmatmul.f32.gmra.mxu0 %v367
      %v431 = vpop.f32.mrf.mxu0
      %v432 = vadd.f32 %v360, %v431
      %433 = vmatmul.f32.gmra.mxu0 %v370
      %v434 = vpop.f32.mrf.mxu0
      %v435 = vadd.f32 %v360, %v434
      %436 = vmatmul.f32.gmra.mxu0 %v373
      %v437 = vpop.f32.mrf.mxu0
      %v438 = vadd.f32 %v360, %v437
      %439 = vmatmul.f32.gmra.mxu0 %v376
      %v440 = vpop.f32.mrf.mxu0
      %v441 = vadd.f32 %v360, %v440
      %442 = vmatmul.f32.gmra.mxu0 %v379
      %v443 = vpop.f32.mrf.mxu0
      %v444 = vadd.f32 %v360, %v443
      %445 = vmatmul.f32.gmra.mxu0 %v382
      %v446 = vpop.f32.mrf.mxu0
      %v447 = vadd.f32 %v360, %v446
      %448 = vmatmul.f32.gmra.mxu0 %v385
      %v449 = vpop.f32.mrf.mxu0
      %v450 = vadd.f32 %v360, %v449
      %451 = vmatmul.f32.gmra.mxu0 %v388
      %v452 = vpop.f32.mrf.mxu0
      %v453 = vadd.f32 %v360, %v452
      %454 = vmatmul.f32.gmra.mxu0 %v391
      %v455 = vpop.f32.mrf.mxu0
      %v456 = vadd.f32 %v360, %v455
      %457 = vmatmul.f32.gmra.mxu0 %v394
      %v458 = vpop.f32.mrf.mxu0
      %v459 = vadd.f32 %v360, %v458
      %460 = vmatmul.f32.gmra.mxu0 %v397
      %v461 = vpop.f32.mrf.mxu0
      %v462 = vadd.f32 %v360, %v461
      %463 = vmatmul.f32.gmra.mxu0 %v400
      %v464 = vpop.f32.mrf.mxu0
      %v465 = vadd.f32 %v360, %v464
      %466 = vmatmul.f32.gmra.mxu0 %v403
      %v467 = vpop.f32.mrf.mxu0
      %v468 = vadd.f32 %v360, %v467
      %469 = vmatmul.f32.gmra.mxu0 %v406
      %v470 = vpop.f32.mrf.mxu0
      %v471 = vadd.f32 %v360, %v470
      %472 = vmatmul.f32.gmra.mxu0 %v409
      %v473 = vpop.f32.mrf.mxu0
      %v474 = vadd.f32 %v360, %v473
      %475 = vdwg.mxu0
      %v476 = vmax.f32 %v429, 0.0
      %v477 = vmax.f32 %v432, 0.0
      %v478 = vmax.f32 %v435, 0.0
      %v479 = vmax.f32 %v438, 0.0
      %v480 = vmax.f32 %v441, 0.0
      %v481 = vmax.f32 %v444, 0.0
      %v482 = vmax.f32 %v447, 0.0
      %v483 = vmax.f32 %v450, 0.0
      %v484 = vmax.f32 %v453, 0.0
      %v485 = vmax.f32 %v456, 0.0
      %v486 = vmax.f32 %v459, 0.0
      %v487 = vmax.f32 %v462, 0.0
      %v488 = vmax.f32 %v465, 0.0
      %v489 = vmax.f32 %v468, 0.0
      %v490 = vmax.f32 %v471, 0.0
      %v491 = vmax.f32 %v474, 0.0
      %v492 = vld [vmem:[%s3] sm:$0xff]
      %v493 = vld [vmem:[%s3 + $0x8] sm:$0xff]
      %v494 = vld [vmem:[%s3 + $0x10] sm:$0xff]
      %v495 = vld [vmem:[%s3 + $0x18] sm:$0xff]
      %v496 = vld [vmem:[%s4] sm:$0x1]
      %v498 = vperm.slane %v496, 0
      %v501 = vsel %vm362, %v476, 0
      %v504 = vsel %vm362, %v477, 0
      %v507 = vsel %vm362, %v478, 0
      %v510 = vsel %vm362, %v479, 0
      %v513 = vsel %vm362, %v480, 0
      %v516 = vsel %vm362, %v481, 0
      %v519 = vsel %vm362, %v482, 0
      %v522 = vsel %vm362, %v483, 0
      %v525 = vsel %vm362, %v484, 0
      %v528 = vsel %vm362, %v485, 0
      %v531 = vsel %vm362, %v486, 0
      %v534 = vsel %vm362, %v487, 0
      %v537 = vsel %vm362, %v488, 0
      %v540 = vsel %vm362, %v489, 0
      %v543 = vsel %vm362, %v490, 0
      %v546 = vsel %vm362, %v491, 0
      %548 = vmatpush.msra.mxu0 0.0
      %549 = vmatpush.msra.mxu0 0.0
      %550 = vmatpush.msra.mxu0 0.0
      %551 = vmatpush.msra.mxu0 0.0
      %552 = vmatpush.msra.mxu0 0.0
      %553 = vmatpush.msra.mxu0 0.0
      %554 = vmatpush.msra.mxu0 0.0
      %555 = vmatpush.msra.mxu0 0.0
      %556 = vmatpush.msra.mxu0 0.0
      %557 = vmatpush.msra.mxu0 0.0
      %558 = vmatpush.msra.mxu0 0.0
      %559 = vmatpush.msra.mxu0 0.0
      %560 = vmatpush.msra.mxu0 %v495
      %561 = vmatpush.msra.mxu0 %v494
      %562 = vmatpush.msra.mxu0 %v493
      %563 = vmatpush.msra.mxu0 %v492
      %564 = vmatmul.f32.gmra.mxu0 %v501
      %v565 = vpop.f32.mrf.mxu0
      %v566 = vadd.f32 %v498, %v565
      %567 = vmatmul.f32.gmra.mxu0 %v504
      %v568 = vpop.f32.mrf.mxu0
      %v569 = vadd.f32 %v498, %v568
      %570 = vmatmul.f32.gmra.mxu0 %v507
      %v571 = vpop.f32.mrf.mxu0
      %v572 = vadd.f32 %v498, %v571
      %573 = vmatmul.f32.gmra.mxu0 %v510
      %v574 = vpop.f32.mrf.mxu0
      %v575 = vadd.f32 %v498, %v574
      %576 = vmatmul.f32.gmra.mxu0 %v513
      %v577 = vpop.f32.mrf.mxu0
      %v578 = vadd.f32 %v498, %v577
      %579 = vmatmul.f32.gmra.mxu0 %v516
      %v580 = vpop.f32.mrf.mxu0
      %v581 = vadd.f32 %v498, %v580
      %582 = vmatmul.f32.gmra.mxu0 %v519
      %v583 = vpop.f32.mrf.mxu0
      %v584 = vadd.f32 %v498, %v583
      %585 = vmatmul.f32.gmra.mxu0 %v522
      %v586 = vpop.f32.mrf.mxu0
      %v587 = vadd.f32 %v498, %v586
      %588 = vmatmul.f32.gmra.mxu0 %v525
      %v589 = vpop.f32.mrf.mxu0
      %v590 = vadd.f32 %v498, %v589
      %591 = vmatmul.f32.gmra.mxu0 %v528
      %v592 = vpop.f32.mrf.mxu0
      %v593 = vadd.f32 %v498, %v592
      %594 = vmatmul.f32.gmra.mxu0 %v531
      %v595 = vpop.f32.mrf.mxu0
      %v596 = vadd.f32 %v498, %v595
      %597 = vmatmul.f32.gmra.mxu0 %v534
      %v598 = vpop.f32.mrf.mxu0
      %v599 = vadd.f32 %v498, %v598
      %600 = vmatmul.f32.gmra.mxu0 %v537
      %v601 = vpop.f32.mrf.mxu0
      %v602 = vadd.f32 %v498, %v601
      %603 = vmatmul.f32.gmra.mxu0 %v540
      %v604 = vpop.f32.mrf.mxu0
      %v605 = vadd.f32 %v498, %v604
      %606 = vmatmul.f32.gmra.mxu0 %v543
      %v607 = vpop.f32.mrf.mxu0
      %v608 = vadd.f32 %v498, %v607
      %609 = vmatmul.f32.gmra.mxu0 %v546
      %v610 = vpop.f32.mrf.mxu0
      %v611 = vadd.f32 %v498, %v610
      %612 = vdwg.mxu0
      %v613 = vmax.f32 %v566, 0.0
      %v614 = vmax.f32 %v569, 0.0
      %v615 = vmax.f32 %v572, 0.0
      %v616 = vmax.f32 %v575, 0.0
      %v617 = vmax.f32 %v578, 0.0
      %v618 = vmax.f32 %v581, 0.0
      %v619 = vmax.f32 %v584, 0.0
      %v620 = vmax.f32 %v587, 0.0
      %v621 = vmax.f32 %v590, 0.0
      %v622 = vmax.f32 %v593, 0.0
      %v623 = vmax.f32 %v596, 0.0
      %v624 = vmax.f32 %v599, 0.0
      %v625 = vmax.f32 %v602, 0.0
      %v626 = vmax.f32 %v605, 0.0
      %v627 = vmax.f32 %v608, 0.0
      %v628 = vmax.f32 %v611, 0.0
      %v629 = vld [vmem:[%s5] sm:$0xff]
      %v630 = vld [vmem:[%s5 + $0x8] sm:$0xff]
      %v631 = vld [vmem:[%s5 + $0x10] sm:$0xff]
      %v632 = vld [vmem:[%s5 + $0x18] sm:$0xff]
      %v633 = vld [vmem:[%s5 + $0x20] sm:$0xff]
      %v634 = vld [vmem:[%s5 + $0x28] sm:$0xff]
      %v635 = vld [vmem:[%s5 + $0x30] sm:$0xff]
      %v636 = vld [vmem:[%s5 + $0x38] sm:$0xff]
      %v637 = vld [vmem:[%s6] sm:$0x1]
      %v639 = vperm.slane %v637, 0
      %vm641 = vcmask 523264
      %v643 = vsel %vm641, %v613, 0
      %v646 = vsel %vm641, %v614, 0
      %v649 = vsel %vm641, %v615, 0
      %v652 = vsel %vm641, %v616, 0
      %v655 = vsel %vm641, %v617, 0
      %v658 = vsel %vm641, %v618, 0
      %v661 = vsel %vm641, %v619, 0
      %v664 = vsel %vm641, %v620, 0
      %v667 = vsel %vm641, %v621, 0
      %v670 = vsel %vm641, %v622, 0
      %v673 = vsel %vm641, %v623, 0
      %v676 = vsel %vm641, %v624, 0
      %v679 = vsel %vm641, %v625, 0
      %v682 = vsel %vm641, %v626, 0
      %v685 = vsel %vm641, %v627, 0
      %v688 = vsel %vm641, %v628, 0
      %690 = vmatpush.msra.mxu0 0.0
      %691 = vmatpush.msra.mxu0 0.0
      %692 = vmatpush.msra.mxu0 0.0
      %693 = vmatpush.msra.mxu0 0.0
      %694 = vmatpush.msra.mxu0 0.0
      %695 = vmatpush.msra.mxu0 0.0
      %696 = vmatpush.msra.mxu0 0.0
      %697 = vmatpush.msra.mxu0 0.0
      %698 = vmatpush.msra.mxu0 %v636
      %699 = vmatpush.msra.mxu0 %v635
      %700 = vmatpush.msra.mxu0 %v634
      %701 = vmatpush.msra.mxu0 %v633
      %702 = vmatpush.msra.mxu0 %v632
      %703 = vmatpush.msra.mxu0 %v631
      %704 = vmatpush.msra.mxu0 %v630
      %705 = vmatpush.msra.mxu0 %v629
      %706 = vmatmul.f32.gmra.mxu0 %v643
      %v707 = vpop.f32.mrf.mxu0
      %v708 = vadd.f32 %v639, %v707
      %709 = vmatmul.f32.gmra.mxu0 %v646
      %v710 = vpop.f32.mrf.mxu0
      %v711 = vadd.f32 %v639, %v710
      %712 = vmatmul.f32.gmra.mxu0 %v649
      %v713 = vpop.f32.mrf.mxu0
      %v714 = vadd.f32 %v639, %v713
      %715 = vmatmul.f32.gmra.mxu0 %v652
      %v716 = vpop.f32.mrf.mxu0
      %v717 = vadd.f32 %v639, %v716
      %718 = vmatmul.f32.gmra.mxu0 %v655
      %v719 = vpop.f32.mrf.mxu0
      %v720 = vadd.f32 %v639, %v719
      %721 = vmatmul.f32.gmra.mxu0 %v658
      %v722 = vpop.f32.mrf.mxu0
      %v723 = vadd.f32 %v639, %v722
      %724 = vmatmul.f32.gmra.mxu0 %v661
      %v725 = vpop.f32.mrf.mxu0
      %v726 = vadd.f32 %v639, %v725
      %727 = vmatmul.f32.gmra.mxu0 %v664
      %v728 = vpop.f32.mrf.mxu0
      %v729 = vadd.f32 %v639, %v728
      %730 = vmatmul.f32.gmra.mxu0 %v667
      %v731 = vpop.f32.mrf.mxu0
      %v732 = vadd.f32 %v639, %v731
      %733 = vmatmul.f32.gmra.mxu0 %v670
      %v734 = vpop.f32.mrf.mxu0
      %v735 = vadd.f32 %v639, %v734
      %736 = vmatmul.f32.gmra.mxu0 %v673
      %v737 = vpop.f32.mrf.mxu0
      %v738 = vadd.f32 %v639, %v737
      %739 = vmatmul.f32.gmra.mxu0 %v676
      %v740 = vpop.f32.mrf.mxu0
      %v741 = vadd.f32 %v639, %v740
      %742 = vmatmul.f32.gmra.mxu0 %v679
      %v743 = vpop.f32.mrf.mxu0
      %v744 = vadd.f32 %v639, %v743
      %745 = vmatmul.f32.gmra.mxu0 %v682
      %v746 = vpop.f32.mrf.mxu0
      %v747 = vadd.f32 %v639, %v746
      %748 = vmatmul.f32.gmra.mxu0 %v685
      %v749 = vpop.f32.mrf.mxu0
      %v750 = vadd.f32 %v639, %v749
      %751 = vmatmul.f32.gmra.mxu0 %v688
      %v752 = vpop.f32.mrf.mxu0
      %v753 = vadd.f32 %v639, %v752
      %754 = vdwg.mxu0
      %v755 = vmax.f32 %v708, 0.0
      %v756 = vmax.f32 %v711, 0.0
      %v757 = vmax.f32 %v714, 0.0
      %v758 = vmax.f32 %v717, 0.0
      %v759 = vmax.f32 %v720, 0.0
      %v760 = vmax.f32 %v723, 0.0
      %v761 = vmax.f32 %v726, 0.0
      %v762 = vmax.f32 %v729, 0.0
      %v763 = vmax.f32 %v732, 0.0
      %v764 = vmax.f32 %v735, 0.0
      %v765 = vmax.f32 %v738, 0.0
      %v766 = vmax.f32 %v741, 0.0
      %v767 = vmax.f32 %v744, 0.0
      %v768 = vmax.f32 %v747, 0.0
      %v769 = vmax.f32 %v750, 0.0
      %v770 = vmax.f32 %v753, 0.0
      %v771 = vld [vmem:[%s7] sm:$0xff]
      %v772 = vld [vmem:[%s7 + $0x8] sm:$0xff]
      %v773 = vld [vmem:[%s7 + $0x10] sm:$0xff]
      %v774 = vld [vmem:[%s7 + $0x18] sm:$0xff]
      %v775 = vld [vmem:[#allocation2] sm:$0x1]
      %v777 = vperm.slane %v775, 0
      %v780 = vsel %vm362, %v755, 0
      %v783 = vsel %vm362, %v756, 0
      %v786 = vsel %vm362, %v757, 0
      %v789 = vsel %vm362, %v758, 0
      %v792 = vsel %vm362, %v759, 0
      %v795 = vsel %vm362, %v760, 0
      %v798 = vsel %vm362, %v761, 0
      %v801 = vsel %vm362, %v762, 0
      %v804 = vsel %vm362, %v763, 0
      %v807 = vsel %vm362, %v764, 0
      %v810 = vsel %vm362, %v765, 0
      %v813 = vsel %vm362, %v766, 0
      %v816 = vsel %vm362, %v767, 0
      %v819 = vsel %vm362, %v768, 0
      %v822 = vsel %vm362, %v769, 0
      %v825 = vsel %vm362, %v770, 0
      %827 = vmatpush.msra.mxu0 0.0
      %828 = vmatpush.msra.mxu0 0.0
      %829 = vmatpush.msra.mxu0 0.0
      %830 = vmatpush.msra.mxu0 0.0
      %831 = vmatpush.msra.mxu0 0.0
      %832 = vmatpush.msra.mxu0 0.0
      %833 = vmatpush.msra.mxu0 0.0
      %834 = vmatpush.msra.mxu0 0.0
      %835 = vmatpush.msra.mxu0 0.0
      %836 = vmatpush.msra.mxu0 0.0
      %837 = vmatpush.msra.mxu0 0.0
      %838 = vmatpush.msra.mxu0 0.0
      %839 = vmatpush.msra.mxu0 %v774
      %840 = vmatpush.msra.mxu0 %v773
      %841 = vmatpush.msra.mxu0 %v772
      %842 = vmatpush.msra.mxu0 %v771
      %843 = vmatmul.f32.gmra.mxu0 %v780
      %v844 = vpop.f32.mrf.mxu0
      %v845 = vadd.f32 %v777, %v844
      %846 = vmatmul.f32.gmra.mxu0 %v783
      %v847 = vpop.f32.mrf.mxu0
      %v848 = vadd.f32 %v777, %v847
      %849 = vmatmul.f32.gmra.mxu0 %v786
      %v850 = vpop.f32.mrf.mxu0
      %v851 = vadd.f32 %v777, %v850
      %852 = vmatmul.f32.gmra.mxu0 %v789
      %v853 = vpop.f32.mrf.mxu0
      %v854 = vadd.f32 %v777, %v853
      %855 = vmatmul.f32.gmra.mxu0 %v792
      %v856 = vpop.f32.mrf.mxu0
      %v857 = vadd.f32 %v777, %v856
      %858 = vmatmul.f32.gmra.mxu0 %v795
      %v859 = vpop.f32.mrf.mxu0
      %v860 = vadd.f32 %v777, %v859
      %861 = vmatmul.f32.gmra.mxu0 %v798
      %v862 = vpop.f32.mrf.mxu0
      %v863 = vadd.f32 %v777, %v862
      %864 = vmatmul.f32.gmra.mxu0 %v801
      %v865 = vpop.f32.mrf.mxu0
      %v866 = vadd.f32 %v777, %v865
      %867 = vmatmul.f32.gmra.mxu0 %v804
      %v868 = vpop.f32.mrf.mxu0
      %v869 = vadd.f32 %v777, %v868
      %870 = vmatmul.f32.gmra.mxu0 %v807
      %v871 = vpop.f32.mrf.mxu0
      %v872 = vadd.f32 %v777, %v871
      %873 = vmatmul.f32.gmra.mxu0 %v810
      %v874 = vpop.f32.mrf.mxu0
      %v875 = vadd.f32 %v777, %v874
      %876 = vmatmul.f32.gmra.mxu0 %v813
      %v877 = vpop.f32.mrf.mxu0
      %v878 = vadd.f32 %v777, %v877
      %879 = vmatmul.f32.gmra.mxu0 %v816
      %v880 = vpop.f32.mrf.mxu0
      %v881 = vadd.f32 %v777, %v880
      %882 = vmatmul.f32.gmra.mxu0 %v819
      %v883 = vpop.f32.mrf.mxu0
      %v884 = vadd.f32 %v777, %v883
      %885 = vmatmul.f32.gmra.mxu0 %v822
      %v886 = vpop.f32.mrf.mxu0
      %v887 = vadd.f32 %v777, %v886
      %888 = vmatmul.f32.gmra.mxu0 %v825
      %v889 = vpop.f32.mrf.mxu0
      %v890 = vadd.f32 %v777, %v889
      %891 = vdwg.mxu0
      %vm892 = vcmask 7168
      %893 = vst.msk [vmem:[%s336] sm:$0xff] %vm892, %v845
      %894 = vst.msk [vmem:[%s336 + $0x8] sm:$0xff] %vm892, %v848
      %895 = vst.msk [vmem:[%s336 + $0x10] sm:$0xff] %vm892, %v851
      %896 = vst.msk [vmem:[%s336 + $0x18] sm:$0xff] %vm892, %v854
      %897 = vst.msk [vmem:[%s336 + $0x20] sm:$0xff] %vm892, %v857
      %898 = vst.msk [vmem:[%s336 + $0x28] sm:$0xff] %vm892, %v860
      %899 = vst.msk [vmem:[%s336 + $0x30] sm:$0xff] %vm892, %v863
      %900 = vst.msk [vmem:[%s336 + $0x38] sm:$0xff] %vm892, %v866
      %901 = vst.msk [vmem:[%s336 + $0x40] sm:$0xff] %vm892, %v869
      %902 = vst.msk [vmem:[%s336 + $0x48] sm:$0xff] %vm892, %v872
      %903 = vst.msk [vmem:[%s336 + $0x50] sm:$0xff] %vm892, %v875
      %904 = vst.msk [vmem:[%s336 + $0x58] sm:$0xff] %vm892, %v878
      %905 = vst.msk [vmem:[%s336 + $0x60] sm:$0xff] %vm892, %v881
      %906 = vst.msk [vmem:[%s336 + $0x68] sm:$0xff] %vm892, %v884
      %907 = vst.msk [vmem:[%s336 + $0x70] sm:$0xff] %vm892, %v887
      %908 = vst.msk [vmem:[%s336 + $0x78] sm:$0xff] %vm892, %v890
      %s909 = smul.u32 16, %s22
      %p910 = scmp.lt.s32.totalorder %s909, 31
      %s911 = scalar_select %p910, %s909, 31
      %s912 = smul.addr %s911, 8
      %s913 = scalar_lea.vmem %s9, %s912
      // Predicated region
      $region57: #{tpu_custom_call.1} parent=55 // pred_check
        %p914 = pneg %p234
      $region58: #{tpu_custom_call.1} parent=55 // pred_check_branch
        %916 = sbr.rel (%p914) target = $region60
      $region59: #{tpu_custom_call.1} parent=55 // pred_region
        %s917 = smul.u32 16, %s22
      $region60: #{tpu_custom_call.1} parent=55 // pred_fallthru
        _
    $region56: #{tpu_custom_call.1} parent=5 // pred_fallthru
      _
    %p918 = scmp.le.s32.totalorder 2, %s17
    // Predicated region
    $region61: #{tpu_custom_call.1} parent=5 // pred_check
      %p919 = pneg %p918
    $region62: #{tpu_custom_call.1} parent=5 // pred_check_branch
      %921 = sbr.rel (%p919) target = $region64
    $region63: #{tpu_custom_call.1} parent=5 // pred_region
      %s922 = ssub.s32 %s17, 2
      // Predicated region
      $region65: #{tpu_custom_call.1} parent=63 // pred_check
        %p923 = pneg %p240
      $region66: #{tpu_custom_call.1} parent=63 // pred_check_branch
        %925 = sbr.rel (%p923) target = $region68
      $region67: #{tpu_custom_call.1} parent=63 // pred_region
        %s926 = smul.u32 16, %s23
        %p927 = scmp.lt.s32.totalorder %s926, 31
        %s928 = scalar_select %p927, %s926, 31
        %s929 = smul.addr %s928, 8
        %s930 = scalar_lea.vmem %s9, %s929
      $region68: #{tpu_custom_call.1} parent=63 // pred_fallthru
        _
    $region64: #{tpu_custom_call.1} parent=5 // pred_fallthru
      _
  $region6: #{tpu_custom_call.1} parent=0 // loop_footer
    %s21 = sadd.s32 1, %s17
  $region7: #{tpu_custom_call.1} parent=0 // loop_footer_branch
    %16 = sbr.rel target = $region3
  $region8: #{tpu_custom_call.1} parent=0 // loop_exit
    _

</llo_original>
